<compile_context>
chip_gen: v7x
topology: tpu7x:2x2x1
jax: 0.10.0
libtpu: 0.0.40
codegen_flags: <defaults>
</compile_context>

<pallas_src>
import functools

import jax
import jax.numpy as jnp
from jax.experimental import pallas as pl
from jax.experimental.pallas import tpu as pltpu


# ----------------------------------------------------------------------------
# layout plumbing: tile planning / padding (outside the kernels)
# ----------------------------------------------------------------------------
_LANE = 128


def _round_up(n, m):
    return ((n + m - 1) // m) * m


def _plan(dim, pref, align=_LANE):
    """cdiv-based tile plan: n_tiles = cdiv(dim, pref), tile aligned to `align`.

    Returns (tile, padded) with padded == n_tiles * tile, so the tile always
    divides the padded extent and padding waste is capped at one alignment
    unit per tile (instead of padding up to a full preferred tile).
    """
    n = max(1, -(-dim // pref))
    tile = _round_up(-(-dim // n), align)
    return tile, n * tile


def _pad2d(x, rows, cols):
    r, c = x.shape
    if r == rows and c == cols:
        return x
    return jnp.pad(x, ((0, rows - r), (0, cols - c)))


def _vmem_limit_bytes():
    """Per-generation VMEM budget (v7x only has 64 MiB physical)."""
    try:
        info = pltpu.get_tpu_info()
        cap = int(getattr(info, "vmem_capacity_bytes", 64 * 1024 * 1024))
        return int(min(cap * 3 // 4, 96 * 1024 * 1024))
    except Exception:
        return 32 * 1024 * 1024


_VMEM_LIMIT = _vmem_limit_bytes()


# ----------------------------------------------------------------------------
# Kernel 1: plain tiled matmul  O = X @ W   (bf16 in, f32 acc, bf16/f32 out)
#   used for (a) the fused per-type encoder and (b) per-layer HW = H @ W.
# ----------------------------------------------------------------------------
def _mm_kernel(x_ref, w_ref, o_ref):
    o_ref[...] = jnp.dot(x_ref[...], w_ref[...],
                         preferred_element_type=jnp.float32).astype(o_ref.dtype)


def _mm_kernel_acc(x_ref, w_ref, o_ref, acc_ref):
    k = pl.program_id(2)

    @pl.when(k == 0)
    def _():
        acc_ref[...] = jnp.zeros_like(acc_ref)

    acc_ref[...] += jnp.dot(x_ref[...], w_ref[...],
                            preferred_element_type=jnp.float32)

    @pl.when(k == pl.num_programs(2) - 1)
    def _():
        o_ref[...] = acc_ref[...].astype(o_ref.dtype)


def matmul_padded(x, w, *, tm, tk, tn, out_dtype):
    """x:[Mp,Kp] bf16, w:[Kp,Np] bf16; tiles must divide the padded extents."""
    Mp, Kp = x.shape
    Kp2, Np = w.shape
    assert Kp == Kp2 and Mp % tm == 0 and Kp % tk == 0 and Np % tn == 0
    nk = Kp // tk

    if nk == 1:
        grid_spec = pltpu.PrefetchScalarGridSpec(
            num_scalar_prefetch=0,
            grid=(Mp // tm, Np // tn),
            in_specs=[
                pl.BlockSpec((tm, tk), lambda i, j: (i, 0)),
                pl.BlockSpec((tk, tn), lambda i, j: (0, j)),
            ],
            out_specs=pl.BlockSpec((tm, tn), lambda i, j: (i, j)),
        )
        kernel, dims = _mm_kernel, ("parallel", "parallel")
    else:
        grid_spec = pltpu.PrefetchScalarGridSpec(
            num_scalar_prefetch=0,
            grid=(Mp // tm, Np // tn, nk),
            in_specs=[
                pl.BlockSpec((tm, tk), lambda i, j, k: (i, k)),
                pl.BlockSpec((tk, tn), lambda i, j, k: (k, j)),
            ],
            out_specs=pl.BlockSpec((tm, tn), lambda i, j, k: (i, j)),
            scratch_shapes=[pltpu.VMEM((tm, tn), jnp.float32)],
        )
        kernel, dims = _mm_kernel_acc, ("parallel", "parallel", "arbitrary")

    return pl.pallas_call(
        kernel,
        out_shape=jax.ShapeDtypeStruct((Mp, Np), out_dtype),
        grid_spec=grid_spec,
        compiler_params=pltpu.CompilerParams(
            dimension_semantics=dims, vmem_limit_bytes=_VMEM_LIMIT),
    )(x, w)


# ----------------------------------------------------------------------------
# Kernel 2: graph aggregation  O = act( A_hat @ HW + b )
#   A_hat, HW are pre-padded bf16; bias + ELU stay f32 in the epilogue.
# ----------------------------------------------------------------------------
def _agg_kernel(a_ref, hw_ref, b_ref, o_ref, *, apply_elu):
    out = jnp.dot(a_ref[...], hw_ref[...],
                  preferred_element_type=jnp.float32) + b_ref[...]
    if apply_elu:
        # ELU(alpha=1): x if x > 0 else exp(x) - 1   (expm1 -> EUP slot)
        out = jnp.where(out > 0, out, jnp.expm1(out))
    o_ref[...] = out.astype(o_ref.dtype)


def _agg_kernel_acc(a_ref, hw_ref, b_ref, o_ref, acc_ref, *, apply_elu):
    k = pl.program_id(2)

    @pl.when(k == 0)
    def _():
        acc_ref[...] = jnp.zeros_like(acc_ref)

    acc_ref[...] += jnp.dot(a_ref[...], hw_ref[...],
                            preferred_element_type=jnp.float32)

    @pl.when(k == pl.num_programs(2) - 1)
    def _():
        out = acc_ref[...] + b_ref[...]
        if apply_elu:
            out = jnp.where(out > 0, out, jnp.expm1(out))
        o_ref[...] = out.astype(o_ref.dtype)


def aggregate_padded(a, hw, b, *, tm, tk, tn, out_dtype, apply_elu):
    """a:[Mp,Kp] bf16, hw:[Kp,Np] bf16, b:[1,Np] f32; tiles divide extents."""
    Mp, Kp = a.shape
    Kp2, Np = hw.shape
    assert Kp == Kp2 and Mp % tm == 0 and Kp % tk == 0 and Np % tn == 0
    nk = Kp // tk

    if nk == 1:
        grid_spec = pltpu.PrefetchScalarGridSpec(
            num_scalar_prefetch=0,
            grid=(Mp // tm, Np // tn),
            in_specs=[
                pl.BlockSpec((tm, tk), lambda i, j: (i, 0)),
                pl.BlockSpec((tk, tn), lambda i, j: (0, j)),
                pl.BlockSpec((1, tn), lambda i, j: (0, j)),
            ],
            out_specs=pl.BlockSpec((tm, tn), lambda i, j: (i, j)),
        )
        kernel = functools.partial(_agg_kernel, apply_elu=apply_elu)
        dims = ("parallel", "parallel")
    else:
        grid_spec = pltpu.PrefetchScalarGridSpec(
            num_scalar_prefetch=0,
            grid=(Mp // tm, Np // tn, nk),
            in_specs=[
                pl.BlockSpec((tm, tk), lambda i, j, k: (i, k)),
                pl.BlockSpec((tk, tn), lambda i, j, k: (k, j)),
                pl.BlockSpec((1, tn), lambda i, j, k: (0, j)),
            ],
            out_specs=pl.BlockSpec((tm, tn), lambda i, j, k: (i, j)),
            scratch_shapes=[pltpu.VMEM((tm, tn), jnp.float32)],
        )
        kernel = functools.partial(_agg_kernel_acc, apply_elu=apply_elu)
        dims = ("parallel", "parallel", "arbitrary")

    return pl.pallas_call(
        kernel,
        out_shape=jax.ShapeDtypeStruct((Mp, Np), out_dtype),
        grid_spec=grid_spec,
        compiler_params=pltpu.CompilerParams(
            dimension_semantics=dims, vmem_limit_bytes=_VMEM_LIMIT),
    )(a, hw, b)


# ----------------------------------------------------------------------------
# Fused per-node-type encoders: one matmul
#   X_aug rows place each type's raw features in its own column slot and carry
#   a one-hot type indicator; W_aug stacks the per-type weights block-wise and
#   appends the per-type biases as rows.  X_aug @ W_aug == concat_t(x_t@W_t+b_t)
# ----------------------------------------------------------------------------
def _build_fused_encoder(x_list, fc_params, n_nodes_padded, hidden_padded):
    n_types = len(x_list)
    k_dims = [int(x.shape[1]) for x in x_list]
    k_total = sum(k_dims) + n_types
    tk, KP = _plan(k_total, 1024)

    blocks, off = [], 0
    for t, x in enumerate(x_list):
        n_t, k_t = x.shape
        onehot = jnp.zeros((n_t, n_types), jnp.float32).at[:, t].set(1.0)
        block = jnp.concatenate(
            [jnp.zeros((n_t, off), jnp.float32),
             x.astype(jnp.float32),
             jnp.zeros((n_t, sum(k_dims) - off - k_t), jnp.float32),
             onehot], axis=1)
        blocks.append(block)
        off += k_t
    x_cat = jnp.concatenate(blocks, axis=0)                       # [N, k_total]
    x_aug = _pad2d(x_cat, n_nodes_padded, KP).astype(jnp.bfloat16)

    w_stack = jnp.concatenate([W.astype(jnp.float32) for (W, _) in fc_params],
                              axis=0)                             # [sum K_t, H]
    b_stack = jnp.stack([b.astype(jnp.float32) for (_, b) in fc_params],
                        axis=0)                                   # [n_types, H]
    w_aug = jnp.concatenate([w_stack, b_stack], axis=0)           # [k_total, H]
    w_aug = _pad2d(w_aug, KP, hidden_padded).astype(jnp.bfloat16)
    return x_aug, w_aug, tk


# ----------------------------------------------------------------------------
# Trainer / GraphModel('GCN') forward
# ----------------------------------------------------------------------------
def trainer_forward(params, x_list, adj_norm, e_feat=None):
    del e_feat  # unused on the GCN path (matches GraphModel.forward dispatch)

    n_nodes = adj_norm.shape[0]
    hidden = params["fc_list"][0][0].shape[1]
    layer_out_dims = [int(W.shape[1]) for (W, _) in params["layers"]]
    num_layers = len(layer_out_dims)

    # ---- one consistent padded layout across the whole forward -------------
    t_node, NP = _plan(n_nodes, 512)                  # rows AND A-reduction dim
    t_h0, HP0 = _plan(hidden, 512)                    # encoder output dim
    out_plans = [_plan(d, 512) for d in layer_out_dims]

    # ---- adjacency: pad + bf16 cast ONCE, reused by every layer ------------
    adj_p = _pad2d(adj_norm.astype(jnp.float32), NP, NP).astype(jnp.bfloat16)

    # ---- fused per-type encoders: single pallas_call, bf16 padded output ---
    x_aug, w_aug, tk_enc = _build_fused_encoder(x_list, params["fc_list"], NP, HP0)
    h = matmul_padded(x_aug, w_aug, tm=t_node, tk=tk_enc, tn=t_h0,
                      out_dtype=jnp.bfloat16)          # [NP, HP0] bf16 (padded)

    # ---- GraphConv layers: h <- act( A_hat @ (h @ W) + b ) -----------------
    # (dropout p=0.5 between layers is identity in eval-mode forward)
    for l, (W, b) in enumerate(params["layers"]):
        in_pad = HP0 if l == 0 else out_plans[l - 1][1]
        t_out, OP = out_plans[l]
        last = (l == num_layers - 1)

        w_p = _pad2d(W.astype(jnp.float32), in_pad, OP).astype(jnp.bfloat16)
        b_p = _pad2d(b.astype(jnp.float32).reshape(1, -1), 1, OP)

        # HW = h @ W  (small; hidden dim kept fully resident as a single K tile)
        hw = matmul_padded(h, w_p, tm=t_node, tk=in_pad, tn=t_out,
                           out_dtype=jnp.bfloat16)
        # O = act( A_hat @ HW + b ); bf16 padded between layers, f32 logits last
        h = aggregate_padded(adj_p, hw, b_p, tm=t_node, tk=t_node, tn=t_out,
                             out_dtype=jnp.float32 if last else jnp.bfloat16,
                             apply_elu=not last)

    # only the final logits are sliced back to the logical shape
    return h[:n_nodes, :layer_out_dims[-1]]


# ----------------------------------------------------------------------------
# Deterministic parameter / input construction
# ----------------------------------------------------------------------------
def make_params(key, in_dims, hidden, num_classes, num_layers):
    keys = jax.random.split(key, 2 * len(in_dims) + 2 * num_layers)
    ki = iter(range(len(keys)))

    fc_list = []
    for d in in_dims:
        W = jax.random.normal(keys[next(ki)], (d, hidden), jnp.float32) * 0.1
        b = jax.random.normal(keys[next(ki)], (hidden,), jnp.float32) * 0.01
        fc_list.append((W, b))

    layers = []
    dims = [hidden] * num_layers + [num_classes]
    for l in range(num_layers):
        W = jax.random.normal(keys[next(ki)], (dims[l], dims[l + 1]),
                              jnp.float32) * 0.1
        b = jax.random.normal(keys[next(ki)], (dims[l + 1],), jnp.float32) * 0.01
        layers.append((W, b))

    return {"fc_list": fc_list, "layers": layers}


def make_norm_adj(key, n_nodes):
    # random undirected graph + self loops, symmetric norm D^-1/2 (A+I) D^-1/2
    a = (jax.random.uniform(key, (n_nodes, n_nodes)) < 0.3).astype(jnp.float32)
    a = jnp.maximum(a, a.T)
    a = a + jnp.eye(n_nodes, dtype=jnp.float32)
    a = jnp.minimum(a, 1.0)
    deg = a.sum(axis=1)
    d_inv_sqrt = 1.0 / jnp.sqrt(deg)
    return a * d_inv_sqrt[:, None] * d_inv_sqrt[None, :]


if __name__ == "__main__":
    key = jax.random.PRNGKey(0)
    k_adj, k_x0, k_x1, k_par = jax.random.split(key, 4)

    # small, forward-consistent shapes
    in_dims = [12, 20]          # two node types with different raw feature dims
    nodes_per_type = [8, 8]
    n_nodes = sum(nodes_per_type)
    hidden = 32
    num_classes = 4
    num_layers = 2

    x_list = [
        jax.random.normal(k_x0, (nodes_per_type[0], in_dims[0]), jnp.float32),
        jax.random.normal(k_x1, (nodes_per_type[1], in_dims[1]), jnp.float32),
    ]
    adj_norm = make_norm_adj(k_adj, n_nodes)
    params = make_params(k_par, in_dims, hidden, num_classes, num_layers)

    logits = trainer_forward(params, x_list, adj_norm, e_feat=None)
    logits = jax.block_until_ready(logits)

    assert logits.shape == (n_nodes, num_classes), logits.shape
    assert jnp.all(jnp.isfinite(logits))
    print("KERNEL_OK")
</pallas_src>

<mosaic_0001>
module attributes {stable_mosaic.version = 11 : i64} {
  func.func @_mm_kernel(%arg0: i32, %arg1: i32, %arg2: memref<128x128xbf16, #tpu.memory_space<vmem>>, %arg3: memref<128x128xbf16, #tpu.memory_space<vmem>>, %arg4: memref<128x128xbf16, #tpu.memory_space<vmem>>) attributes {dimension_semantics = [#tpu.dimension_semantics<parallel>, #tpu.dimension_semantics<parallel>], iteration_bounds = array<i64: 1, 1>, scalar_prefetch = 0 : i64, scratch_operands = 0 : i64, tpu.core_type = #tpu.core_type<tc>, window_params = [{transform_indices = @transform_0, window_bounds = array<i64: 128, 128>}, {transform_indices = @transform_1, window_bounds = array<i64: 128, 128>}, {transform_indices = @transform_2, window_bounds = array<i64: 128, 128>}]} {
    %c0 = arith.constant 0 : index
    %c0_0 = arith.constant 0 : index
    %0 = vector.load %arg2[%c0, %c0_0] : memref<128x128xbf16, #tpu.memory_space<vmem>>, vector<128x128xbf16>
    %c0_1 = arith.constant 0 : index
    %c0_2 = arith.constant 0 : index
    %1 = vector.load %arg3[%c0_1, %c0_2] : memref<128x128xbf16, #tpu.memory_space<vmem>>, vector<128x128xbf16>
    %cst = arith.constant dense<0.000000e+00> : vector<128x128xf32>
    %2 = tpu.matmul %0, %1, %cst {dimension_numbers = #tpu.dot_dimension_numbers<[1], [0], [0], [1], [0, 0, 1, 1], [], []>} : vector<128x128xbf16>, vector<128x128xbf16>, vector<128x128xf32> -> vector<128x128xf32>
    %3 = arith.truncf %2 : vector<128x128xf32> to vector<128x128xbf16>
    %c0_3 = arith.constant 0 : index
    %c0_4 = arith.constant 0 : index
    %4 = vector.load %arg4[%c0_3, %c0_4] : memref<128x128xbf16, #tpu.memory_space<vmem>>, vector<128x128xbf16>
    tpu.vector_store %arg4[%c0_3, %c0_4], %3 {strides = array<i32>} : memref<128x128xbf16, #tpu.memory_space<vmem>>, vector<128x128xbf16>,
    return
  }
  func.func @transform_0(%arg0: i32, %arg1: i32) -> (i32, i32) {
    %c0_i32 = arith.constant 0 : i32
    %c0_i32_0 = arith.constant 0 : i32
    return %arg0, %c0_i32 : i32, i32
  }
  func.func @transform_1(%arg0: i32, %arg1: i32) -> (i32, i32) {
    %c0_i32 = arith.constant 0 : i32
    %c0_i32_0 = arith.constant 0 : i32
    return %c0_i32, %arg1 : i32, i32
  }
  func.func @transform_2(%arg0: i32, %arg1: i32) -> (i32, i32) {
    %c0_i32 = arith.constant 0 : i32
    return %arg0, %arg1 : i32, i32
  }
}

</mosaic_0001>

<llo_original>
// kernel: tpu_custom_call.1
$region0: #{tpu_custom_call.1}
  #allocation0 [shape = 'u32[]', space=smem, size = 0x4, offset = 0x4, fixed_abs, tag = 'smem constant byte address 0x4 - core index']
  #allocation1 [shape = 'u32[144,128]{1,0:T(1,128)}', space=vmem, size = 0x12000, scoped, tag = 'internal scratch']
  %s0 = inlined_call_operand.hbm [shape: bf16[128,128], index: 0, kind: input, shape index: {}]
  %s1 = inlined_call_operand.hbm [shape: bf16[128,128], index: 1, kind: input, shape index: {}]
  %s2 = inlined_call_operand.hbm [shape: bf16[128,128], index: 2, kind: output, shape index: {}]
  %s3 = sld [smem:[#allocation0]]
  $region26: #{tpu_custom_call.1} parent=0
    _
  %s5 = ssub.s32 1, %s3
  %s6 = scalar_select 0, %s5, %s3
  $region1: #{tpu_custom_call.1} parent=0
    #allocation2 [shape = 'u8[32768]{0}', space=vmem, size = 0x8000, scoped, tag = 'input window, operand 0, single buffered']
    #allocation3 [shape = 's32[1]{0}', space=sflag, size = 0x4, scoped, tag = 'scoped memory for tpu_custom_call.1']
    #allocation4 [shape = 's32[1]{0}', space=sflag, size = 0x4, scoped, tag = 'scoped memory for tpu_custom_call.1']
    #allocation5 [shape = 'u8[32768]{0}', space=vmem, size = 0x8000, scoped, tag = 'input window, operand 1, single buffered']
    #allocation6 [shape = 's32[1]{0}', space=sflag, size = 0x4, scoped, tag = 'scoped memory for tpu_custom_call.1']
    #allocation7 [shape = 'u8[32768]{0}', space=vmem, size = 0x8000, scoped, tag = 'output window, operand 0, single buffered']
    %7 = vsyncpa [#allocation3], 0
    %8 = vsyncpa [#allocation6], 0
    %9 = vsyncpa [#allocation4], 0
    // Predicated region
    $region2: #{tpu_custom_call.1} parent=1 // pred_check
      _
    $region3: #{tpu_custom_call.1} parent=1 // pred_check_branch
      %11 = sbr.rel (0) target = $region5
    $region4: #{tpu_custom_call.1} parent=1 // pred_region
      %s13 = ssub.s32 1024, 1024
      %14 = vsyncadd [#allocation3], %s13
      %s15 = sshll.u32 [#allocation2], 4
      %s16 = int_to_ptr.vmem [resolvable:$true] %s15
      %21 = dma.hbm_to_vmem [thread:$0]  %s0, 1024, %s16, [#allocation3], 64, 64, 4
    $region5: #{tpu_custom_call.1} parent=1 // pred_fallthru
      _
    // Predicated region
    $region6: #{tpu_custom_call.1} parent=1 // pred_check
      _
    $region7: #{tpu_custom_call.1} parent=1 // pred_check_branch
      %23 = sbr.rel (0) target = $region9
    $region8: #{tpu_custom_call.1} parent=1 // pred_region
      %s25 = ssub.s32 1024, 1024
      %26 = vsyncadd [#allocation6], %s25
      %s27 = sshll.u32 [#allocation5], 4
      %s28 = int_to_ptr.vmem [resolvable:$true] %s27
      %33 = dma.hbm_to_vmem [thread:$0]  %s1, 1024, %s28, [#allocation6], 64, 64, 4
    $region9: #{tpu_custom_call.1} parent=1 // pred_fallthru
      _
    // Predicated region
    $region10: #{tpu_custom_call.1} parent=1 // pred_check
      _
    $region11: #{tpu_custom_call.1} parent=1 // pred_check_branch
      %35 = sbr.rel (0) target = $region13
    $region12: #{tpu_custom_call.1} parent=1 // pred_region
      %36 = dma.done [#allocation3], 1024
    $region13: #{tpu_custom_call.1} parent=1 // pred_fallthru
      _
    // Predicated region
    $region14: #{tpu_custom_call.1} parent=1 // pred_check
      _
    $region15: #{tpu_custom_call.1} parent=1 // pred_check_branch
      %38 = sbr.rel (0) target = $region17
    $region16: #{tpu_custom_call.1} parent=1 // pred_region
      %39 = dma.done [#allocation6], 1024
    $region17: #{tpu_custom_call.1} parent=1 // pred_fallthru
      _
    %v41 = vld [vmem:[#allocation2] sm:$0xf]
    %v42 = vld [vmem:[#allocation2 + $0x4] sm:$0xf]
    %v43 = vld [vmem:[#allocation2 + $0x8] sm:$0xf]
    %v44 = vld [vmem:[#allocation2 + $0xc] sm:$0xf]
    %v45 = vld [vmem:[#allocation2 + $0x10] sm:$0xf]
    %v46 = vld [vmem:[#allocation2 + $0x14] sm:$0xf]
    %v47 = vld [vmem:[#allocation2 + $0x18] sm:$0xf]
    %v48 = vld [vmem:[#allocation2 + $0x1c] sm:$0xf]
    %v49 = vld [vmem:[#allocation2 + $0x20] sm:$0xf]
    %v50 = vld [vmem:[#allocation2 + $0x24] sm:$0xf]
    %v51 = vld [vmem:[#allocation2 + $0x28] sm:$0xf]
    %v52 = vld [vmem:[#allocation2 + $0x2c] sm:$0xf]
    %v53 = vld [vmem:[#allocation2 + $0x30] sm:$0xf]
    %v54 = vld [vmem:[#allocation2 + $0x34] sm:$0xf]
    %v55 = vld [vmem:[#allocation2 + $0x38] sm:$0xf]
    %v56 = vld [vmem:[#allocation2 + $0x3c] sm:$0xf]
    %v57 = vld [vmem:[#allocation5] sm:$0xf]
    %v58 = vld [vmem:[#allocation5 + $0x4] sm:$0xf]
    %v59 = vld [vmem:[#allocation5 + $0x8] sm:$0xf]
    %v60 = vld [vmem:[#allocation5 + $0xc] sm:$0xf]
    %v61 = vld [vmem:[#allocation5 + $0x10] sm:$0xf]
    %v62 = vld [vmem:[#allocation5 + $0x14] sm:$0xf]
    %v63 = vld [vmem:[#allocation5 + $0x18] sm:$0xf]
    %v64 = vld [vmem:[#allocation5 + $0x1c] sm:$0xf]
    %v65 = vld [vmem:[#allocation5 + $0x20] sm:$0xf]
    %v66 = vld [vmem:[#allocation5 + $0x24] sm:$0xf]
    %v67 = vld [vmem:[#allocation5 + $0x28] sm:$0xf]
    %v68 = vld [vmem:[#allocation5 + $0x2c] sm:$0xf]
    %v69 = vld [vmem:[#allocation5 + $0x30] sm:$0xf]
    %v70 = vld [vmem:[#allocation5 + $0x34] sm:$0xf]
    %v71 = vld [vmem:[#allocation5 + $0x38] sm:$0xf]
    %v72 = vld [vmem:[#allocation5 + $0x3c] sm:$0xf]
    %v89 = vunpack.c.l.b16 %v41
    %v90 = vunpack.c.l.b16 %v42
    %v91 = vunpack.c.l.b16 %v43
    %v92 = vunpack.c.l.b16 %v44
    %v93 = vunpack.c.l.b16 %v45
    %v94 = vunpack.c.l.b16 %v46
    %v95 = vunpack.c.l.b16 %v47
    %v96 = vunpack.c.l.b16 %v48
    %v97 = vunpack.c.l.b16 %v49
    %v98 = vunpack.c.l.b16 %v50
    %v99 = vunpack.c.l.b16 %v51
    %v100 = vunpack.c.l.b16 %v52
    %v101 = vunpack.c.l.b16 %v53
    %v102 = vunpack.c.l.b16 %v54
    %v103 = vunpack.c.l.b16 %v55
    %v104 = vunpack.c.l.b16 %v56
    %v105 = vpack.c.b16 %v90, %v89
    %v106 = vpack.c.b16 %v92, %v91
    %v107 = vpack.c.b16 %v94, %v93
    %v108 = vpack.c.b16 %v96, %v95
    %v109 = vpack.c.b16 %v98, %v97
    %v110 = vpack.c.b16 %v100, %v99
    %v111 = vpack.c.b16 %v102, %v101
    %v112 = vpack.c.b16 %v104, %v103
    %v137 = vunpack.c.l.b16 %v57
    %v138 = vunpack.c.l.b16 %v58
    %v139 = vunpack.c.l.b16 %v59
    %v140 = vunpack.c.l.b16 %v60
    %v141 = vunpack.c.l.b16 %v61
    %v142 = vunpack.c.l.b16 %v62
    %v143 = vunpack.c.l.b16 %v63
    %v144 = vunpack.c.l.b16 %v64
    %v145 = vunpack.c.l.b16 %v65
    %v146 = vunpack.c.l.b16 %v66
    %v147 = vunpack.c.l.b16 %v67
    %v148 = vunpack.c.l.b16 %v68
    %v149 = vunpack.c.l.b16 %v69
    %v150 = vunpack.c.l.b16 %v70
    %v151 = vunpack.c.l.b16 %v71
    %v152 = vunpack.c.l.b16 %v72
    %v153 = vpack.c.b16 %v138, %v137
    %v154 = vpack.c.b16 %v140, %v139
    %v155 = vpack.c.b16 %v142, %v141
    %v156 = vpack.c.b16 %v144, %v143
    %v157 = vpack.c.b16 %v146, %v145
    %v158 = vpack.c.b16 %v148, %v147
    %v159 = vpack.c.b16 %v150, %v149
    %v160 = vpack.c.b16 %v152, %v151
    %169 = vmatprep.subr.bf16.mxu0 0
    %170 = vmatpush1.bf16.msra.mxu0 %v153
    %171 = vmatprep.subr.bf16.mxu0 0
    %172 = vmatpush1.bf16.msra.mxu0 %v154
    %173 = vmatprep.subr.bf16.mxu0 0
    %174 = vmatpush1.bf16.msra.mxu0 %v155
    %175 = vmatprep.subr.bf16.mxu0 0
    %176 = vmatpush1.bf16.msra.mxu0 %v156
    %177 = vmatprep.subr.bf16.mxu0 0
    %178 = vmatpush1.bf16.msra.mxu0 %v157
    %179 = vmatprep.subr.bf16.mxu0 0
    %180 = vmatpush1.bf16.msra.mxu0 %v158
    %181 = vmatprep.subr.bf16.mxu0 0
    %182 = vmatpush1.bf16.msra.mxu0 %v159
    %183 = vmatprep.subr.bf16.mxu0 0
    %184 = vmatpush1.bf16.msra.mxu0 %v160
    %185 = vmatprep.subr.bf16.mxu0 0
    %186 = vmatpush1.bf16.msra.mxu0 0
    %187 = vmatprep.subr.bf16.mxu0 0
    %188 = vmatpush1.bf16.msra.mxu0 0
    %189 = vmatprep.subr.bf16.mxu0 0
    %190 = vmatpush1.bf16.msra.mxu0 0
    %191 = vmatprep.subr.bf16.mxu0 0
    %192 = vmatpush1.bf16.msra.mxu0 0
    %193 = vmatprep.subr.bf16.mxu0 0
    %194 = vmatpush1.bf16.msra.mxu0 0
    %195 = vmatprep.subr.bf16.mxu0 0
    %196 = vmatpush1.bf16.msra.mxu0 0
    %197 = vmatprep.subr.bf16.mxu0 0
    %198 = vmatpush1.bf16.msra.mxu0 0
    %199 = vmatprep.subr.bf16.mxu0 0
    %200 = vmatpush1.bf16.msra.mxu0 0
    %201 = vmatprep.mubr.bf16.mxu0 0
    %202 = vmatmul.mubr.bf16.gmra.mrb[0].mxu0 %v105
    %v203 = vpop.f32.mrb[0].mxu0
    %v204 = vadd.f32 0.0, %v203
    %v205 = vpop.f32.mrb[0].mxu0
    %v206 = vpop.f32.mrb[0].mxu0
    %v207 = vadd.f32 0.0, %v206
    %v208 = vpop.f32.mrb[0].mxu0
    %209 = vmatprep.mubr.bf16.mxu0 0
    %210 = vmatmul.mubr.bf16.gmra.mrb[0].mxu0 %v106
    %v211 = vpop.f32.mrb[0].mxu0
    %v212 = vadd.f32 0.0, %v211
    %v213 = vpop.f32.mrb[0].mxu0
    %v214 = vpop.f32.mrb[0].mxu0
    %v215 = vadd.f32 0.0, %v214
    %v216 = vpop.f32.mrb[0].mxu0
    %217 = vmatprep.mubr.bf16.mxu0 0
    %218 = vmatmul.mubr.bf16.gmra.mrb[0].mxu0 %v107
    %v219 = vpop.f32.mrb[0].mxu0
    %v220 = vadd.f32 0.0, %v219
    %v221 = vpop.f32.mrb[0].mxu0
    %v222 = vpop.f32.mrb[0].mxu0
    %v223 = vadd.f32 0.0, %v222
    %v224 = vpop.f32.mrb[0].mxu0
    %225 = vmatprep.mubr.bf16.mxu0 0
    %226 = vmatmul.mubr.bf16.gmra.mrb[0].mxu0 %v108
    %v227 = vpop.f32.mrb[0].mxu0
    %v228 = vadd.f32 0.0, %v227
    %v229 = vpop.f32.mrb[0].mxu0
    %v230 = vpop.f32.mrb[0].mxu0
    %v231 = vadd.f32 0.0, %v230
    %v232 = vpop.f32.mrb[0].mxu0
    %233 = vmatprep.mubr.bf16.mxu0 0
    %234 = vmatmul.mubr.bf16.gmra.mrb[0].mxu0 %v109
    %v235 = vpop.f32.mrb[0].mxu0
    %v236 = vadd.f32 0.0, %v235
    %v237 = vpop.f32.mrb[0].mxu0
    %v238 = vpop.f32.mrb[0].mxu0
    %v239 = vadd.f32 0.0, %v238
    %v240 = vpop.f32.mrb[0].mxu0
    %241 = vmatprep.mubr.bf16.mxu0 0
    %242 = vmatmul.mubr.bf16.gmra.mrb[0].mxu0 %v110
    %v243 = vpop.f32.mrb[0].mxu0
    %v244 = vadd.f32 0.0, %v243
    %v245 = vpop.f32.mrb[0].mxu0
    %v246 = vpop.f32.mrb[0].mxu0
    %v247 = vadd.f32 0.0, %v246
    %v248 = vpop.f32.mrb[0].mxu0
    %249 = vmatprep.mubr.bf16.mxu0 0
    %250 = vmatmul.mubr.bf16.gmra.mrb[0].mxu0 %v111
    %v251 = vpop.f32.mrb[0].mxu0
    %v252 = vadd.f32 0.0, %v251
    %v253 = vpop.f32.mrb[0].mxu0
    %v254 = vpop.f32.mrb[0].mxu0
    %v255 = vadd.f32 0.0, %v254
    %v256 = vpop.f32.mrb[0].mxu0
    %257 = vmatprep.mubr.bf16.mxu0 0
    %258 = vmatmul.mubr.bf16.gmra.mrb[0].mxu0 %v112
    %v259 = vpop.f32.mrb[0].mxu0
    %v260 = vadd.f32 0.0, %v259
    %v261 = vpop.f32.mrb[0].mxu0
    %v262 = vpop.f32.mrb[0].mxu0
    %v263 = vadd.f32 0.0, %v262
    %v264 = vpop.f32.mrb[0].mxu0
    %265 = vdwg.mxu0
    %v266 = vpack.c.bf16 %v207, %v204
    %v267 = vpack.c.bf16 %v215, %v212
    %v268 = vpack.c.bf16 %v223, %v220
    %v269 = vpack.c.bf16 %v231, %v228
    %v270 = vpack.c.bf16 %v239, %v236
    %v271 = vpack.c.bf16 %v247, %v244
    %v272 = vpack.c.bf16 %v255, %v252
    %v273 = vpack.c.bf16 %v263, %v260
    %v282 = vunpack.c.l.b16 %v266
    %v283 = vunpack.c.h.b16 %v266
    %v284 = vunpack.c.l.b16 %v267
    %v285 = vunpack.c.h.b16 %v267
    %v286 = vunpack.c.l.b16 %v268
    %v287 = vunpack.c.h.b16 %v268
    %v288 = vunpack.c.l.b16 %v269
    %v289 = vunpack.c.h.b16 %v269
    %v290 = vunpack.c.l.b16 %v270
    %v291 = vunpack.c.h.b16 %v270
    %v292 = vunpack.c.l.b16 %v271
    %v293 = vunpack.c.h.b16 %v271
    %v294 = vunpack.c.l.b16 %v272
    %v295 = vunpack.c.h.b16 %v272
    %v296 = vunpack.c.l.b16 %v273
    %v297 = vunpack.c.h.b16 %v273
    %v298 = vpack.c.b16 %v282, %v282
    %v299 = vpack.c.b16 %v283, %v283
    %v300 = vpack.c.b16 %v284, %v284
    %v301 = vpack.c.b16 %v285, %v285
    %v302 = vpack.c.b16 %v286, %v286
    %v303 = vpack.c.b16 %v287, %v287
    %v304 = vpack.c.b16 %v288, %v288
    %v305 = vpack.c.b16 %v289, %v289
    %v306 = vpack.c.b16 %v290, %v290
    %v307 = vpack.c.b16 %v291, %v291
    %v308 = vpack.c.b16 %v292, %v292
    %v309 = vpack.c.b16 %v293, %v293
    %v310 = vpack.c.b16 %v294, %v294
    %v311 = vpack.c.b16 %v295, %v295
    %v312 = vpack.c.b16 %v296, %v296
    %v313 = vpack.c.b16 %v297, %v297
    %330 = vst [vmem:[#allocation7] sm:$0xf] %v298
    %331 = vst [vmem:[#allocation7 + $0x4] sm:$0xf] %v299
    %332 = vst [vmem:[#allocation7 + $0x8] sm:$0xf] %v300
    %333 = vst [vmem:[#allocation7 + $0xc] sm:$0xf] %v301
    %334 = vst [vmem:[#allocation7 + $0x10] sm:$0xf] %v302
    %335 = vst [vmem:[#allocation7 + $0x14] sm:$0xf] %v303
    %336 = vst [vmem:[#allocation7 + $0x18] sm:$0xf] %v304
    %337 = vst [vmem:[#allocation7 + $0x1c] sm:$0xf] %v305
    %338 = vst [vmem:[#allocation7 + $0x20] sm:$0xf] %v306
    %339 = vst [vmem:[#allocation7 + $0x24] sm:$0xf] %v307
    %340 = vst [vmem:[#allocation7 + $0x28] sm:$0xf] %v308
    %341 = vst [vmem:[#allocation7 + $0x2c] sm:$0xf] %v309
    %342 = vst [vmem:[#allocation7 + $0x30] sm:$0xf] %v310
    %343 = vst [vmem:[#allocation7 + $0x34] sm:$0xf] %v311
    %344 = vst [vmem:[#allocation7 + $0x38] sm:$0xf] %v312
    %345 = vst [vmem:[#allocation7 + $0x3c] sm:$0xf] %v313
    // Predicated region
    $region18: #{tpu_custom_call.1} parent=1 // pred_check
      _
    $region19: #{tpu_custom_call.1} parent=1 // pred_check_branch
      %347 = sbr.rel (0) target = $region21
    $region20: #{tpu_custom_call.1} parent=1 // pred_region
      %s349 = ssub.s32 1024, 1024
      %350 = vsyncadd [#allocation4], %s349
      %s351 = sshll.u32 [#allocation7], 4
      %s352 = int_to_ptr.vmem [resolvable:$true] %s351
      %357 = dma.vmem_to_hbm [thread:$0]  %s352, 1024, %s2, [#allocation4], 64, 64, 4
    $region21: #{tpu_custom_call.1} parent=1 // pred_fallthru
      _
    // Predicated region
    $region22: #{tpu_custom_call.1} parent=1 // pred_check
      _
    $region23: #{tpu_custom_call.1} parent=1 // pred_check_branch
      %359 = sbr.rel (0) target = $region25
    $region24: #{tpu_custom_call.1} parent=1 // pred_region
      %360 = dma.done [#allocation4], 1024
    $region25: #{tpu_custom_call.1} parent=1 // pred_fallthru
      _
    %361 = vsyncpa [#allocation3], 1
    %362 = vsyncpa [#allocation6], 1
    %363 = vsyncpa [#allocation4], 1

</llo_original>
